<compile_context>
chip_gen: v7x
topology: tpu7x:2x2x1
jax: 0.10.0
libtpu: 0.0.40
codegen_flags: <defaults>
</compile_context>

<pallas_src>
import functools

import jax
import jax.numpy as jnp
from jax.experimental import pallas as pl
from jax.experimental.pallas import tpu as pltpu

LANE = 128
VMEM_LIMIT = 48 * 1024 * 1024  # below physical VMEM on all of v5e/v6e/v7x


def _round_up(x, m):
    return (x + m - 1) // m * m


# --------------------------------------------------------------------------
# Kernel 1: layer 1 (+ row-local h1 @ W2 so layer 2 only needs one A-product)
#   grid = (n_p // tm, n_p // tk)
#   acc  = sum_k A[i, k-tile] @ X[k-tile]        (bf16 inputs, f32 accumulator)
#   finalize (k == last, all in f32):
#       h1 = relu(acc @ W1 + b1)                 -> H1 output (f32)
#       g1 = h1 @ W2                             -> G1 output (bf16, streamed to L2)
#   X is VMEM-resident; the k-chunk is sliced in-kernel.
# --------------------------------------------------------------------------
def layer1_kernel(a_ref, x_ref, w1_ref, b1_ref, w2_ref,
                  h1_ref, g1_ref, acc_ref, *, tk):
    k = pl.program_id(1)

    @pl.when(k == 0)
    def _():
        acc_ref[...] = jnp.zeros_like(acc_ref)

    off = pl.multiple_of(k * tk, tk)
    acc_ref[...] += jnp.dot(a_ref[...], x_ref[pl.ds(off, tk), :],
                            preferred_element_type=jnp.float32)

    @pl.when(k == pl.num_programs(1) - 1)
    def _():
        ax = acc_ref[...]                                   # f32 (tm, f_p)
        h1 = jnp.maximum(
            jnp.dot(ax, w1_ref[...], preferred_element_type=jnp.float32)
            + b1_ref[...],
            0.0,
        )
        h1_ref[...] = h1.astype(h1_ref.dtype)
        g1_ref[...] = jnp.dot(
            h1, w2_ref[...], preferred_element_type=jnp.float32
        ).astype(g1_ref.dtype)


# --------------------------------------------------------------------------
# Kernel 2: layer 2 aggregation
#   acc = sum_k A[i, k-tile] @ G1[k-tile] ; finalize: H2 = acc + b2   (f32)
#   G1 is VMEM-resident; the k-chunk is sliced in-kernel.
# --------------------------------------------------------------------------
def layer2_kernel(a_ref, g1_ref, b2_ref, h2_ref, acc_ref, *, tk):
    k = pl.program_id(1)

    @pl.when(k == 0)
    def _():
        acc_ref[...] = jnp.zeros_like(acc_ref)

    off = pl.multiple_of(k * tk, tk)
    acc_ref[...] += jnp.dot(a_ref[...], g1_ref[pl.ds(off, tk), :],
                            preferred_element_type=jnp.float32)

    @pl.when(k == pl.num_programs(1) - 1)
    def _():
        h2_ref[...] = (acc_ref[...] + b2_ref[...]).astype(h2_ref.dtype)


# --------------------------------------------------------------------------
# Kernel 3: inner-product decoder  adj[i, j] = Z[i] @ Z[j]^T   (f32)
# --------------------------------------------------------------------------
def decoder_kernel(zi_ref, zj_ref, adj_ref):
    adj_ref[...] = jax.lax.dot_general(
        zi_ref[...], zj_ref[...],
        dimension_numbers=(((1,), (1,)), ((), ())),
        preferred_element_type=jnp.float32,
    )


def gae_forward(a_hat, x, w1, b1, w2, b2):
    """Returns (adj_rec, h1, h2). adj_rec is the GAE module output."""
    n, fin = x.shape
    h_dim = w1.shape[1]

    # Pad node count to a multiple of 256 so the reduction tile never falls
    # back to 128; feature axes padded to full 128-lane width.
    n_p = _round_up(n, 256)
    f_p = _round_up(fin, LANE)
    h_p = _round_up(h_dim, LANE)

    # Row tile: fill the 256-wide MXU, but keep >= 2 parallel row tiles so the
    # v7x megacore can split the row axis across its 2 TensorCores.
    tm = min(256, max(128, n_p // 2))
    # Reduction tile: >= 256 always (512 when it divides the padded N).
    tk = 512 if n_p % 512 == 0 else 256

    pad_n = n_p - n
    # Lane-dense, zero-padded operands. Cast-then-pad: no f32 N^2 intermediate.
    a_p = jnp.pad(a_hat.astype(jnp.bfloat16), ((0, pad_n), (0, pad_n)))
    x_p = jnp.pad(x.astype(jnp.bfloat16), ((0, pad_n), (0, f_p - fin)))
    w1_p = jnp.pad(w1, ((0, f_p - fin), (0, h_p - h_dim)))          # f32
    w2_p = jnp.pad(w2, ((0, h_p - h_dim), (0, h_p - h_dim)))        # f32
    b1_p = jnp.pad(b1, (0, h_p - h_dim)).reshape(1, h_p)            # f32
    b2_p = jnp.pad(b2, (0, h_p - h_dim)).reshape(1, h_p)            # f32

    grid_l = (n_p // tm, n_p // tk)

    # ---- layer 1 (+ h1 @ W2) ----
    h1_p, g1_p = pl.pallas_call(
        functools.partial(layer1_kernel, tk=tk),
        grid=grid_l,
        in_specs=[
            pl.BlockSpec((tm, tk), lambda i, k: (i, k)),     # A_hat tile (streamed)
            pl.BlockSpec((n_p, f_p), lambda i, k: (0, 0)),   # X (VMEM-resident)
            pl.BlockSpec((f_p, h_p), lambda i, k: (0, 0)),   # W1 (resident)
            pl.BlockSpec((1, h_p), lambda i, k: (0, 0)),     # b1 (resident)
            pl.BlockSpec((h_p, h_p), lambda i, k: (0, 0)),   # W2 (resident)
        ],
        out_specs=(
            pl.BlockSpec((tm, h_p), lambda i, k: (i, 0)),
            pl.BlockSpec((tm, h_p), lambda i, k: (i, 0)),
        ),
        out_shape=(
            jax.ShapeDtypeStruct((n_p, h_p), jnp.float32),   # H1
            jax.ShapeDtypeStruct((n_p, h_p), jnp.bfloat16),  # G1 = H1 @ W2
        ),
        scratch_shapes=[pltpu.VMEM((tm, f_p), jnp.float32)],
        compiler_params=pltpu.CompilerParams(
            dimension_semantics=("parallel", "arbitrary"),
            vmem_limit_bytes=VMEM_LIMIT),
    )(a_p, x_p, w1_p, b1_p, w2_p)

    # ---- layer 2 ----
    h2_p = pl.pallas_call(
        functools.partial(layer2_kernel, tk=tk),
        grid=grid_l,
        in_specs=[
            pl.BlockSpec((tm, tk), lambda i, k: (i, k)),     # A_hat tile (streamed)
            pl.BlockSpec((n_p, h_p), lambda i, k: (0, 0)),   # G1 (VMEM-resident)
            pl.BlockSpec((1, h_p), lambda i, k: (0, 0)),     # b2 (resident)
        ],
        out_specs=pl.BlockSpec((tm, h_p), lambda i, k: (i, 0)),
        out_shape=jax.ShapeDtypeStruct((n_p, h_p), jnp.float32),
        scratch_shapes=[pltpu.VMEM((tm, h_p), jnp.float32)],
        compiler_params=pltpu.CompilerParams(
            dimension_semantics=("parallel", "arbitrary"),
            vmem_limit_bytes=VMEM_LIMIT),
    )(a_p, g1_p, b2_p)

    # ---- inner-product decoder (writeback-bound: big lane-dense f32 tiles) ----
    td_m = min(256, max(128, n_p // 2))      # >= 2 row tiles for megacore
    td_n = 512 if n_p % 512 == 0 else 256
    adj_p = pl.pallas_call(
        decoder_kernel,
        grid=(n_p // td_m, n_p // td_n),
        in_specs=[
            pl.BlockSpec((td_m, h_p), lambda i, j: (i, 0)),
            pl.BlockSpec((td_n, h_p), lambda i, j: (j, 0)),
        ],
        out_specs=pl.BlockSpec((td_m, td_n), lambda i, j: (i, j)),
        out_shape=jax.ShapeDtypeStruct((n_p, n_p), jnp.float32),
        compiler_params=pltpu.CompilerParams(
            dimension_semantics=("parallel", "parallel"),
            vmem_limit_bytes=VMEM_LIMIT),
    )(h2_p, h2_p)

    h1 = h1_p[:n, :h_dim]
    h2 = h2_p[:n, :h_dim]
    adj_rec = adj_p[:n, :n]
    return adj_rec, h1, h2


# --------------------------------------------------------------------------
# Test harness
# --------------------------------------------------------------------------
def build_normalized_adjacency(key, n_nodes):
    """Symmetric graph, no self loops, no zero-degree nodes; A_hat = D^-1/2 A D^-1/2."""
    rand = jax.random.bernoulli(key, p=0.3, shape=(n_nodes, n_nodes)).astype(jnp.float32)
    a = jnp.clip(rand + rand.T, 0.0, 1.0)
    a = a * (1.0 - jnp.eye(n_nodes))
    ring = jnp.roll(jnp.eye(n_nodes), 1, axis=1)
    a = jnp.clip(a + ring + ring.T, 0.0, 1.0)
    deg = jnp.sum(a, axis=1)
    d_inv_sqrt = 1.0 / jnp.sqrt(deg)
    return a * d_inv_sqrt[:, None] * d_inv_sqrt[None, :]


def ref_forward(a_hat, x, w1, b1, w2, b2):
    """Plain-JAX reference mirroring the kernel's dtype choices
    (bf16 A/X/G1 inputs to the big products, f32 everywhere else)."""
    bf = jnp.bfloat16
    ab = a_hat.astype(bf)
    xb = x.astype(bf)
    ax = jnp.dot(ab, xb, preferred_element_type=jnp.float32)
    h1 = jnp.maximum(jnp.dot(ax, w1, preferred_element_type=jnp.float32) + b1, 0.0)
    g1 = jnp.dot(h1, w2, preferred_element_type=jnp.float32).astype(bf)
    h2 = jnp.dot(ab, g1, preferred_element_type=jnp.float32) + b2
    adj = jax.lax.dot_general(h2, h2, (((1,), (1,)), ((), ())),
                              preferred_element_type=jnp.float32)
    return adj, h1, h2


if __name__ == "__main__":
    N, IN_DIM, H_DIM = 256, 16, 32

    key = jax.random.PRNGKey(0)
    k_adj, k_x, k_w1, k_w2, k_b1, k_b2 = jax.random.split(key, 6)

    a_hat = build_normalized_adjacency(k_adj, N)
    x = jax.random.normal(k_x, (N, IN_DIM), dtype=jnp.float32)

    def glorot(k, shape):
        lim = (6.0 / (shape[0] + shape[1])) ** 0.5
        return jax.random.uniform(k, shape, jnp.float32, -lim, lim)

    w1 = glorot(k_w1, (IN_DIM, H_DIM))
    w2 = glorot(k_w2, (H_DIM, H_DIM))
    b1 = 0.1 * jax.random.normal(k_b1, (H_DIM,), jnp.float32)
    b2 = 0.1 * jax.random.normal(k_b2, (H_DIM,), jnp.float32)

    adj_rec, h1, h2 = gae_forward(a_hat, x, w1, b1, w2, b2)
    jax.block_until_ready((adj_rec, h1, h2))

    adj_ref, h1_ref, h2_ref = ref_forward(a_hat, x, w1, b1, w2, b2)
    # Tolerances cover MXU f32-precision-mode differences between Pallas and XLA.
    assert jnp.allclose(h1, h1_ref, atol=2e-2, rtol=2e-2)
    assert jnp.allclose(h2, h2_ref, atol=2e-2, rtol=2e-2)
    assert jnp.allclose(adj_rec, adj_ref, atol=2e-2, rtol=2e-2)

    print("KERNEL_OK")
</pallas_src>

<mosaic_0001>
module attributes {stable_mosaic.version = 11 : i64} {
  func.func @layer1_kernel(%arg0: i32, %arg1: i32, %arg2: memref<128x256xbf16, #tpu.memory_space<vmem>>, %arg3: memref<256x128xbf16, #tpu.memory_space<vmem>>, %arg4: memref<128x128xf32, #tpu.memory_space<vmem>>, %arg5: memref<1x128xf32, #tpu.memory_space<vmem>>, %arg6: memref<128x128xf32, #tpu.memory_space<vmem>>, %arg7: memref<128x128xf32, #tpu.memory_space<vmem>>, %arg8: memref<128x128xbf16, #tpu.memory_space<vmem>>, %arg9: memref<128x128xf32, #tpu.memory_space<vmem>>) attributes {dimension_semantics = [#tpu.dimension_semantics<parallel>, #tpu.dimension_semantics<arbitrary>], iteration_bounds = array<i64: 2, 1>, scalar_prefetch = 0 : i64, scratch_operands = 1 : i64, tpu.core_type = #tpu.core_type<tc>, window_params = [{transform_indices = @transform_0, window_bounds = array<i64: 128, 256>}, {pipeline_mode = #tpu.pipeline_mode<synchronous>, transform_indices = @transform_1, window_bounds = array<i64: 256, 128>}, {pipeline_mode = #tpu.pipeline_mode<synchronous>, transform_indices = @transform_2, window_bounds = array<i64: 128, 128>}, {pipeline_mode = #tpu.pipeline_mode<synchronous>, transform_indices = @transform_3, window_bounds = array<i64: 1, 128>}, {pipeline_mode = #tpu.pipeline_mode<synchronous>, transform_indices = @transform_4, window_bounds = array<i64: 128, 128>}, {transform_indices = @transform_5, window_bounds = array<i64: 128, 128>}, {transform_indices = @transform_6, window_bounds = array<i64: 128, 128>}]} {
    %c0_i32 = arith.constant 0 : i32
    %0 = arith.cmpi eq, %arg1, %c0_i32 : i32
    %1 = arith.extui %0 : i1 to i32
    %c0_i32_0 = arith.constant 0 : i32
    %2 = arith.cmpi ne, %1, %c0_i32_0 : i32
    scf.if %2 {
      %cst_9 = arith.constant 0.000000e+00 : f32
      %15 = vector.broadcast %cst_9 : f32 to vector<128x128xf32>
      %c0_10 = arith.constant 0 : index
      %c0_11 = arith.constant 0 : index
      %16 = vector.load %arg9[%c0_10, %c0_11] : memref<128x128xf32, #tpu.memory_space<vmem>>, vector<128x128xf32>
      tpu.vector_store %arg9[%c0_10, %c0_11], %15 {strides = array<i32>} : memref<128x128xf32, #tpu.memory_space<vmem>>, vector<128x128xf32>,
    } else {
    }
    %c256_i32 = arith.constant 256 : i32
    %3 = arith.muli %arg1, %c256_i32 : i32
    %4 = tpu.assume_multiple %3, 256 : i32
    %c0 = arith.constant 0 : index
    %c0_1 = arith.constant 0 : index
    %5 = vector.load %arg9[%c0, %c0_1] : memref<128x128xf32, #tpu.memory_space<vmem>>, vector<128x128xf32>
    %c0_2 = arith.constant 0 : index
    %c0_3 = arith.constant 0 : index
    %6 = vector.load %arg2[%c0_2, %c0_3] : memref<128x256xbf16, #tpu.memory_space<vmem>>, vector<128x256xbf16>
    %7 = arith.index_cast %4 : i32 to index
    %c0_4 = arith.constant 0 : index
    %8 = vector.load %arg3[%7, %c0_4] : memref<256x128xbf16, #tpu.memory_space<vmem>>, vector<256x128xbf16>
    %cst = arith.constant dense<0.000000e+00> : vector<128x128xf32>
    %9 = tpu.matmul %6, %8, %cst {dimension_numbers = #tpu.dot_dimension_numbers<[1], [0], [0], [1], [0, 0, 1, 1], [], []>} : vector<128x256xbf16>, vector<256x128xbf16>, vector<128x128xf32> -> vector<128x128xf32>
    %10 = arith.addf %5, %9 : vector<128x128xf32>
    %c0_5 = arith.constant 0 : index
    %c0_6 = arith.constant 0 : index
    %11 = vector.load %arg9[%c0_5, %c0_6] : memref<128x128xf32, #tpu.memory_space<vmem>>, vector<128x128xf32>
    tpu.vector_store %arg9[%c0_5, %c0_6], %10 {strides = array<i32>} : memref<128x128xf32, #tpu.memory_space<vmem>>, vector<128x128xf32>,
    %c0_i32_7 = arith.constant 0 : i32
    %12 = arith.cmpi eq, %arg1, %c0_i32_7 : i32
    %13 = arith.extui %12 : i1 to i32
    %c0_i32_8 = arith.constant 0 : i32
    %14 = arith.cmpi ne, %13, %c0_i32_8 : i32
    scf.if %14 {
      %c0_9 = arith.constant 0 : index
      %c0_10 = arith.constant 0 : index
      %15 = vector.load %arg9[%c0_9, %c0_10] : memref<128x128xf32, #tpu.memory_space<vmem>>, vector<128x128xf32>
      %c0_11 = arith.constant 0 : index
      %c0_12 = arith.constant 0 : index
      %16 = vector.load %arg4[%c0_11, %c0_12] : memref<128x128xf32, #tpu.memory_space<vmem>>, vector<128x128xf32>
      %cst_13 = arith.constant dense<0.000000e+00> : vector<128x128xf32>
      %17 = tpu.matmul %15, %16, %cst_13 {dimension_numbers = #tpu.dot_dimension_numbers<[1], [0], [0], [1], [0, 0, 1, 1], [], []>} : vector<128x128xf32>, vector<128x128xf32>, vector<128x128xf32> -> vector<128x128xf32>
      %c0_14 = arith.constant 0 : index
      %c0_15 = arith.constant 0 : index
      %18 = vector.load %arg5[%c0_14, %c0_15] : memref<1x128xf32, #tpu.memory_space<vmem>>, vector<1x128xf32>
      %19 = vector.broadcast %18 : vector<1x128xf32> to vector<128x128xf32>
      %20 = arith.addf %17, %19 : vector<128x128xf32>
      %cst_16 = arith.constant 0.000000e+00 : f32
      %21 = vector.broadcast %cst_16 : f32 to vector<128x128xf32>
      %22 = arith.maximumf %20, %21 : vector<128x128xf32>
      %c0_17 = arith.constant 0 : index
      %c0_18 = arith.constant 0 : index
      %23 = vector.load %arg7[%c0_17, %c0_18] : memref<128x128xf32, #tpu.memory_space<vmem>>, vector<128x128xf32>
      tpu.vector_store %arg7[%c0_17, %c0_18], %22 {strides = array<i32>} : memref<128x128xf32, #tpu.memory_space<vmem>>, vector<128x128xf32>,
      %c0_19 = arith.constant 0 : index
      %c0_20 = arith.constant 0 : index
      %24 = vector.load %arg6[%c0_19, %c0_20] : memref<128x128xf32, #tpu.memory_space<vmem>>, vector<128x128xf32>
      %cst_21 = arith.constant dense<0.000000e+00> : vector<128x128xf32>
      %25 = tpu.matmul %22, %24, %cst_21 {dimension_numbers = #tpu.dot_dimension_numbers<[1], [0], [0], [1], [0, 0, 1, 1], [], []>} : vector<128x128xf32>, vector<128x128xf32>, vector<128x128xf32> -> vector<128x128xf32>
      %26 = arith.truncf %25 : vector<128x128xf32> to vector<128x128xbf16>
      %c0_22 = arith.constant 0 : index
      %c0_23 = arith.constant 0 : index
      %27 = vector.load %arg8[%c0_22, %c0_23] : memref<128x128xbf16, #tpu.memory_space<vmem>>, vector<128x128xbf16>
      tpu.vector_store %arg8[%c0_22, %c0_23], %26 {strides = array<i32>} : memref<128x128xbf16, #tpu.memory_space<vmem>>, vector<128x128xbf16>,
    } else {
    }
    return
  }
  func.func @transform_0(%arg0: i32, %arg1: i32) -> (i32, i32) {
    %c0_i32 = arith.constant 0 : i32
    return %arg0, %arg1 : i32, i32
  }
  func.func @transform_1(%arg0: i32, %arg1: i32) -> (i32, i32) {
    %c0_i32 = arith.constant 0 : i32
    %c0_i32_0 = arith.constant 0 : i32
    %c0_i32_1 = arith.constant 0 : i32
    return %c0_i32, %c0_i32_0 : i32, i32
  }
  func.func @transform_2(%arg0: i32, %arg1: i32) -> (i32, i32) {
    %c0_i32 = arith.constant 0 : i32
    %c0_i32_0 = arith.constant 0 : i32
    %c0_i32_1 = arith.constant 0 : i32
    return %c0_i32, %c0_i32_0 : i32, i32
  }
  func.func @transform_3(%arg0: i32, %arg1: i32) -> (i32, i32) {
    %c0_i32 = arith.constant 0 : i32
    %c0_i32_0 = arith.constant 0 : i32
    %c0_i32_1 = arith.constant 0 : i32
    return %c0_i32, %c0_i32_0 : i32, i32
  }
  func.func @transform_4(%arg0: i32, %arg1: i32) -> (i32, i32) {
    %c0_i32 = arith.constant 0 : i32
    %c0_i32_0 = arith.constant 0 : i32
    %c0_i32_1 = arith.constant 0 : i32
    return %c0_i32, %c0_i32_0 : i32, i32
  }
  func.func @transform_5(%arg0: i32, %arg1: i32) -> (i32, i32) {
    %c0_i32 = arith.constant 0 : i32
    %c0_i32_0 = arith.constant 0 : i32
    return %arg0, %c0_i32 : i32, i32
  }
  func.func @transform_6(%arg0: i32, %arg1: i32) -> (i32, i32) {
    %c0_i32 = arith.constant 0 : i32
    %c0_i32_0 = arith.constant 0 : i32
    return %arg0, %c0_i32 : i32, i32
  }
}

</mosaic_0001>

<llo_original>
// kernel: tpu_custom_call.1
$region0: #{tpu_custom_call.1}
  #allocation0 [shape = 'u32[]', space=smem, size = 0x4, offset = 0x4, fixed_abs, tag = 'smem constant byte address 0x4 - core index']
  #allocation1 [shape = 'u32[144,128]{1,0:T(1,128)}', space=vmem, size = 0x12000, scoped, tag = 'internal scratch']
  #allocation2 [shape = 'f32[128,128]{1,0:T(8,128)}', space=vmem, size = 0x10000, scoped, tag = 'scratch operand']
  %s0 = inlined_call_operand.hbm [shape: bf16[256,256], index: 0, kind: input, shape index: {}]
  %s1 = inlined_call_operand.hbm [shape: bf16[256,128], index: 1, kind: input, shape index: {}]
  %s2 = inlined_call_operand.hbm [shape: f32[128,128], index: 2, kind: input, shape index: {}]
  %s3 = inlined_call_operand.vmem [shape: f32[1,128], index: 3, kind: input, shape index: {}]
  %s4 = inlined_call_operand.hbm [shape: f32[128,128], index: 4, kind: input, shape index: {}]
  %s5 = inlined_call_operand.hbm [shape: f32[256,128], index: 5, kind: output, shape index: {0}]
  %s6 = inlined_call_operand.hbm [shape: bf16[256,128], index: 6, kind: output, shape index: {1}]
  %7 = xla_tuple %s5, %s6
  %s8 = sld [smem:[#allocation0]]
  $region85: #{tpu_custom_call.1} parent=0
    _
  %s10 = ssub.s32 1, %s8
  %s11 = scalar_select 0, %s10, %s8
  $region1: #{tpu_custom_call.1} parent=0
    #allocation3 [shape = 'u8[131072]{0}', space=vmem, size = 0x20000, scoped, tag = 'input window, operand 0']
    #allocation4 [shape = 's32[2]{0}', space=sflag, size = 0x8, scoped, tag = 'scoped memory for tpu_custom_call.1']
    #allocation5 [shape = 's32[2]{0}', space=sflag, size = 0x8, scoped, tag = 'scoped memory for tpu_custom_call.1']
    #allocation6 [shape = 'u8[65536]{0}', space=vmem, size = 0x10000, scoped, tag = 'input window, operand 1, single buffered']
    #allocation7 [shape = 's32[1]{0}', space=sflag, size = 0x4, scoped, tag = 'scoped memory for tpu_custom_call.1']
    #allocation8 [shape = 'u8[65536]{0}', space=vmem, size = 0x10000, scoped, tag = 'input window, operand 2, single buffered']
    #allocation9 [shape = 'u8[65536]{0}', space=vmem, size = 0x10000, scoped, tag = 'input window, operand 4, single buffered']
    #allocation10 [shape = 's32[1]{0}', space=sflag, size = 0x4, scoped, tag = 'scoped memory for tpu_custom_call.1']
    #allocation11 [shape = 'u8[131072]{0}', space=vmem, size = 0x20000, scoped, tag = 'output window, operand 0']
    #allocation12 [shape = 'u8[65536]{0}', space=vmem, size = 0x10000, scoped, tag = 'output window, operand 1']
    #allocation13 [shape = 's32[2]{0}', space=sflag, size = 0x8, scoped, tag = 'scoped memory for tpu_custom_call.1']
    %12 = vsyncpa [#allocation4], 0
    %s13 = scalar_lea.sflag [#allocation4], 1
    %14 = vsyncpa %s13, 0
    %15 = vsyncpa [#allocation7], 0
    %16 = vsyncpa [#allocation10], 0
    %17 = vsyncpa [#allocation5], 0
    %s18 = scalar_lea.sflag [#allocation5], 1
    %19 = vsyncpa %s18, 0
    %20 = vsyncpa [#allocation13], 0
    %s21 = scalar_lea.sflag [#allocation13], 1
    %22 = vsyncpa %s21, 0
    loop: start=0, step=1, limit=4
    $region2: #{tpu_custom_call.1} parent=1 // loop_pre_header
      _
    $region3: #{tpu_custom_call.1} parent=1 // loop_header
      %s24 = sphi 0, %s28
      %p25 = scmp.ge.s32.totalorder %s24, 4
      %s31 = sphi 0, %s43
      %s32 = sphi 0, %s39
      %s33 = sphi 0, %s31
      %s34 = sphi 0, %s32
      %s35 = sphi 0, %s33
      %s36 = sphi 0, %s34
      %s48 = sphi 0, %s50
      %s51 = sphi 0, %s48
      %s52 = sphi 0, %s51
      %s68 = sphi 0, %s52
      %s72 = sphi 0, %s72
      %s74 = sphi 0, %s72
      %s75 = sphi 0, %s74
      %s89 = sphi 0, %s75
      %s93 = sphi 0, %s93
      %s95 = sphi 0, %s93
      %s96 = sphi 0, %s95
      %s110 = sphi 0, %s96
      %s114 = sphi 0, %s114
      %s116 = sphi 0, %s114
      %s117 = sphi 0, %s116
      %s131 = sphi 0, %s117
      %s135 = sphi 0, %s135
      %s137 = sphi 0, %s135
      %s138 = sphi 0, %s137
      %s152 = sphi 0, %s138
      %s158 = sphi 0, %s160
      %s161 = sphi 0, %s158
      %s162 = sphi 0, %s161
      %s178 = sphi 0, %s162
      %s184 = sphi 0, %s186
      %s187 = sphi 0, %s184
      %s188 = sphi 0, %s187
      %s204 = sphi 0, %s188
    $region4: #{tpu_custom_call.1} parent=1 // loop_header_branch
      %27 = sbr.rel (%p25) target = $region8
    $region5: #{tpu_custom_call.1} parent=1 // loop_body
      %s29 = ssub.s32 %s24, 1
      %s30 = ssub.s32 %s24, 2
      %s37 = sadd.s32 1, %s32
      %p38 = scmp.ge.s32.totalorder %s37, 1
      %s39 = scalar_select %p38, 0, %s37
      %s40 = sadd.s32 1, %s31
      %s41 = scalar_select %p38, %s40, %s31
      %p42 = scmp.ge.s32.totalorder %s41, 2
      %s43 = scalar_select %p42, 0, %s41
      %s44 = ssub.s32 %s31, %s43
      %s45 = ssub.s32 %s32, %s39
      %s46 = sor.u32 %s44, %s45
      %p47 = scmp.eq.s32.totalorder %s46, 0
      %s49 = sadd.s32 %s48, 1
      %s50 = scalar_select %p47, %s48, %s49
      %p53 = pneg %p47
      %p54 = scmp.eq.s32.totalorder %s24, 1
      %p55 = por %p53, %p54
      %p56 = scmp.ne.s32.totalorder %s48, %s51
      %p57 = scmp.eq.s32.totalorder %s24, 0
      %p58 = por %p56, %p57
      %p59 = scmp.ne.s32.totalorder %s48, %s51
      %p60 = scmp.eq.s32.totalorder %s29, 1
      %p61 = por %p59, %p60
      %p62 = scmp.ne.s32.totalorder %s51, %s52
      %p63 = scmp.eq.s32.totalorder %s29, 0
      %p64 = por %p62, %p63
      %p65 = scmp.ne.s32.totalorder %s51, %s52
      %p66 = scmp.eq.s32.totalorder %s30, 1
      %p67 = por %p65, %p66
      %p69 = scmp.ne.s32.totalorder %s52, %s68
      %p70 = scmp.eq.s32.totalorder %s30, 0
      %p71 = por %p69, %p70
      %s73 = sadd.s32 %s72, 1
      %p76 = scmp.eq.s32.totalorder %s24, 1
      %p77 = scmp.ne.s32.totalorder %s72, %s74
      %p78 = scmp.eq.s32.totalorder %s24, 0
      %p79 = por %p77, %p78
      %p80 = scmp.ne.s32.totalorder %s72, %s74
      %p81 = scmp.eq.s32.totalorder %s29, 1
      %p82 = por %p80, %p81
      %p83 = scmp.ne.s32.totalorder %s74, %s75
      %p84 = scmp.eq.s32.totalorder %s29, 0
      %p85 = por %p83, %p84
      %p86 = scmp.ne.s32.totalorder %s74, %s75
      %p87 = scmp.eq.s32.totalorder %s30, 1
      %p88 = por %p86, %p87
      %p90 = scmp.ne.s32.totalorder %s75, %s89
      %p91 = scmp.eq.s32.totalorder %s30, 0
      %p92 = por %p90, %p91
      %s94 = sadd.s32 %s93, 1
      %p97 = scmp.eq.s32.totalorder %s24, 1
      %p98 = scmp.ne.s32.totalorder %s93, %s95
      %p99 = scmp.eq.s32.totalorder %s24, 0
      %p100 = por %p98, %p99
      %p101 = scmp.ne.s32.totalorder %s93, %s95
      %p102 = scmp.eq.s32.totalorder %s29, 1
      %p103 = por %p101, %p102
      %p104 = scmp.ne.s32.totalorder %s95, %s96
      %p105 = scmp.eq.s32.totalorder %s29, 0
      %p106 = por %p104, %p105
      %p107 = scmp.ne.s32.totalorder %s95, %s96
      %p108 = scmp.eq.s32.totalorder %s30, 1
      %p109 = por %p107, %p108
      %p111 = scmp.ne.s32.totalorder %s96, %s110
      %p112 = scmp.eq.s32.totalorder %s30, 0
      %p113 = por %p111, %p112
      %s115 = sadd.s32 %s114, 1
      %p118 = scmp.eq.s32.totalorder %s24, 1
      %p119 = scmp.ne.s32.totalorder %s114, %s116
      %p120 = scmp.eq.s32.totalorder %s24, 0
      %p121 = por %p119, %p120
      %p122 = scmp.ne.s32.totalorder %s114, %s116
      %p123 = scmp.eq.s32.totalorder %s29, 1
      %p124 = por %p122, %p123
      %p125 = scmp.ne.s32.totalorder %s116, %s117
      %p126 = scmp.eq.s32.totalorder %s29, 0
      %p127 = por %p125, %p126
      %p128 = scmp.ne.s32.totalorder %s116, %s117
      %p129 = scmp.eq.s32.totalorder %s30, 1
      %p130 = por %p128, %p129
      %p132 = scmp.ne.s32.totalorder %s117, %s131
      %p133 = scmp.eq.s32.totalorder %s30, 0
      %p134 = por %p132, %p133
      %s136 = sadd.s32 %s135, 1
      %p139 = scmp.eq.s32.totalorder %s24, 1
      %p140 = scmp.ne.s32.totalorder %s135, %s137
      %p141 = scmp.eq.s32.totalorder %s24, 0
      %p142 = por %p140, %p141
      %p143 = scmp.ne.s32.totalorder %s135, %s137
      %p144 = scmp.eq.s32.totalorder %s29, 1
      %p145 = por %p143, %p144
      %p146 = scmp.ne.s32.totalorder %s137, %s138
      %p147 = scmp.eq.s32.totalorder %s29, 0
      %p148 = por %p146, %p147
      %p149 = scmp.ne.s32.totalorder %s137, %s138
      %p150 = scmp.eq.s32.totalorder %s30, 1
      %p151 = por %p149, %p150
      %p153 = scmp.ne.s32.totalorder %s138, %s152
      %p154 = scmp.eq.s32.totalorder %s30, 0
      %p155 = por %p153, %p154
      %s156 = ssub.s32 %s31, %s43
      %p157 = scmp.eq.s32.totalorder %s156, 0
      %s159 = sadd.s32 %s158, 1
      %s160 = scalar_select %p157, %s158, %s159
      %p163 = pneg %p157
      %p164 = scmp.eq.s32.totalorder %s24, 1
      %p165 = por %p163, %p164
      %p166 = scmp.ne.s32.totalorder %s158, %s161
      %p167 = scmp.eq.s32.totalorder %s24, 0
      %p168 = por %p166, %p167
      %p169 = scmp.ne.s32.totalorder %s158, %s161
      %p170 = scmp.eq.s32.totalorder %s29, 1
      %p171 = por %p169, %p170
      %p172 = scmp.ne.s32.totalorder %s161, %s162
      %p173 = scmp.eq.s32.totalorder %s29, 0
      %p174 = por %p172, %p173
      %p175 = scmp.ne.s32.totalorder %s161, %s162
      %p176 = scmp.eq.s32.totalorder %s30, 1
      %p177 = por %p175, %p176
      %p179 = scmp.ne.s32.totalorder %s162, %s178
      %p180 = scmp.eq.s32.totalorder %s30, 0
      %p181 = por %p179, %p180
      %s182 = ssub.s32 %s31, %s43
      %p183 = scmp.eq.s32.totalorder %s182, 0
      %s185 = sadd.s32 %s184, 1
      %s186 = scalar_select %p183, %s184, %s185
      %p189 = pneg %p183
      %p190 = scmp.eq.s32.totalorder %s24, 1
      %p191 = por %p189, %p190
      %p192 = scmp.ne.s32.totalorder %s184, %s187
      %p193 = scmp.eq.s32.totalorder %s24, 0
      %p194 = por %p192, %p193
      %p195 = scmp.ne.s32.totalorder %s184, %s187
      %p196 = scmp.eq.s32.totalorder %s29, 1
      %p197 = por %p195, %p196
      %p198 = scmp.ne.s32.totalorder %s187, %s188
      %p199 = scmp.eq.s32.totalorder %s29, 0
      %p200 = por %p198, %p199
      %p201 = scmp.ne.s32.totalorder %s187, %s188
      %p202 = scmp.eq.s32.totalorder %s30, 1
      %p203 = por %p201, %p202
      %p205 = scmp.ne.s32.totalorder %s188, %s204
      %p206 = scmp.eq.s32.totalorder %s30, 0
      %p207 = por %p205, %p206
      %p208 = scmp.le.s32.totalorder 1, %s24
      %p209 = scmp.lt.s32.totalorder %s24, 3
      %p210 = pnand %p208, %p209
      %p211 = pneg %p210
      // Predicated region
      $region9: #{tpu_custom_call.1} parent=5 // pred_check
        _
      $region10: #{tpu_custom_call.1} parent=5 // pred_check_branch
        %213 = sbr.rel (%p210) target = $region12
      $region11: #{tpu_custom_call.1} parent=5 // pred_region
        %s214 = ssub.s32 %s24, 1
        // Predicated region
        $region13: #{tpu_custom_call.1} parent=11 // pred_check
          %p215 = pneg %p85
        $region14: #{tpu_custom_call.1} parent=11 // pred_check_branch
          %217 = sbr.rel (%p215) target = $region16
        $region15: #{tpu_custom_call.1} parent=11 // pred_region
          %s219 = ssub.s32 2048, 2048
          %220 = vsyncadd [#allocation7], %s219
          %s221 = sshll.u32 [#allocation6], 4
          %s222 = int_to_ptr.vmem [resolvable:$true] %s221
          %227 = dma.hbm_to_vmem [thread:$0]  %s1, 2048, %s222, [#allocation7], 64, 64, 4
        $region16: #{tpu_custom_call.1} parent=11 // pred_fallthru
          _
        // Predicated region
        $region17: #{tpu_custom_call.1} parent=11 // pred_check
          %p228 = pneg %p106
        $region18: #{tpu_custom_call.1} parent=11 // pred_check_branch
          %230 = sbr.rel (%p228) target = $region20
        $region19: #{tpu_custom_call.1} parent=11 // pred_region
          %s232 = ssub.s32 2048, 2048
          %233 = vsyncadd [#allocation7], %s232
          %s234 = sshll.u32 [#allocation8], 4
          %s235 = int_to_ptr.vmem [resolvable:$true] %s234
          %240 = dma.hbm_to_vmem [thread:$0]  %s2, 2048, %s235, [#allocation7], 128, 128, 8
        $region20: #{tpu_custom_call.1} parent=11 // pred_fallthru
          _
        // Predicated region
        $region21: #{tpu_custom_call.1} parent=11 // pred_check
          %p241 = pneg %p127
        $region22: #{tpu_custom_call.1} parent=11 // pred_check_branch
          %243 = sbr.rel (%p241) target = $region24
        $region23: #{tpu_custom_call.1} parent=11 // pred_region
          _
        $region24: #{tpu_custom_call.1} parent=11 // pred_fallthru
          _
        // Predicated region
        $region25: #{tpu_custom_call.1} parent=11 // pred_check
          %p244 = pneg %p148
        $region26: #{tpu_custom_call.1} parent=11 // pred_check_branch
          %246 = sbr.rel (%p244) target = $region28
        $region27: #{tpu_custom_call.1} parent=11 // pred_region
          %s248 = ssub.s32 2048, 2048
          %249 = vsyncadd [#allocation10], %s248
          %s250 = sshll.u32 [#allocation9], 4
          %s251 = int_to_ptr.vmem [resolvable:$true] %s250
          %256 = dma.hbm_to_vmem [thread:$0]  %s4, 2048, %s251, [#allocation10], 128, 128, 8
        $region28: #{tpu_custom_call.1} parent=11 // pred_fallthru
          _
      $region12: #{tpu_custom_call.1} parent=5 // pred_fallthru
        _
      %p257 = scmp.lt.s32.totalorder %s24, 2
      // Predicated region
      $region29: #{tpu_custom_call.1} parent=5 // pred_check
        %p258 = pneg %p257
      $region30: #{tpu_custom_call.1} parent=5 // pred_check_branch
        %260 = sbr.rel (%p258) target = $region32
      $region31: #{tpu_custom_call.1} parent=5 // pred_region
        // Predicated region
        $region33: #{tpu_custom_call.1} parent=31 // pred_check
          %p261 = pneg %p58
        $region34: #{tpu_custom_call.1} parent=31 // pred_check_branch
          %263 = sbr.rel (%p261) target = $region36
        $region35: #{tpu_custom_call.1} parent=31 // pred_region
          %s264 = sand.u32 %s48, 1
          %s265 = scalar_lea.sflag [#allocation4], %s264
          %s266 = sand.u32 %s48, 1
          %s267 = smul.addr %s266, 128
          %s268 = scalar_lea.vmem [#allocation3], %s267
          %s269 = smul.u32 16, %s31
          %s270 = smul.u32 2, %s32
          %s272 = ssub.s32 2048, 2048
          %273 = vsyncadd %s265, %s272
          %s274 = smul.addr %s269, 2
          %s275 = sadd.s32 %s270, %s274
          %s276 = smul.addr %s275, 64
          %s277 = scalar_lea.hbm %s0, %s276
          %s278 = sshll.u32 %s268, 4
          %s279 = int_to_ptr.vmem [resolvable:$true] %s278
          %284 = dma.hbm_to_vmem [thread:$0]  %s277, 2048, %s279, %s265, 128, 128, 8
        $region36: #{tpu_custom_call.1} parent=31 // pred_fallthru
          _
      $region32: #{tpu_custom_call.1} parent=5 // pred_fallthru
        _
      %p285 = scmp.le.s32.totalorder 1, %s24
      %p286 = scmp.lt.s32.totalorder %s24, 3
      %p287 = pnand %p285, %p286
      %p288 = pneg %p287
      // Predicated region
      $region37: #{tpu_custom_call.1} parent=5 // pred_check
        _
      $region38: #{tpu_custom_call.1} parent=5 // pred_check_branch
        %290 = sbr.rel (%p287) target = $region40
      $region39: #{tpu_custom_call.1} parent=5 // pred_region
        %s291 = ssub.s32 %s24, 1
        %s292 = sand.u32 %s51, 1
        %s293 = scalar_lea.sflag [#allocation4], %s292
        %s294 = sand.u32 %s51, 1
        %s295 = smul.addr %s294, 128
        %s296 = scalar_lea.vmem [#allocation3], %s295
        // Predicated region
        $region41: #{tpu_custom_call.1} parent=39 // pred_check
          %p297 = pneg %p64
        $region42: #{tpu_custom_call.1} parent=39 // pred_check_branch
          %299 = sbr.rel (%p297) target = $region44
        $region43: #{tpu_custom_call.1} parent=39 // pred_region
          %300 = dma.done %s293, 2048
        $region44: #{tpu_custom_call.1} parent=39 // pred_fallthru
          _
        // Predicated region
        $region45: #{tpu_custom_call.1} parent=39 // pred_check
          %p301 = pneg %p85
        $region46: #{tpu_custom_call.1} parent=39 // pred_check_branch
          %303 = sbr.rel (%p301) target = $region48
        $region47: #{tpu_custom_call.1} parent=39 // pred_region
          %304 = dma.done [#allocation7], 2048
        $region48: #{tpu_custom_call.1} parent=39 // pred_fallthru
          _
        // Predicated region
        $region49: #{tpu_custom_call.1} parent=39 // pred_check
          %p305 = pneg %p106
        $region50: #{tpu_custom_call.1} parent=39 // pred_check_branch
          %307 = sbr.rel (%p305) target = $region52
        $region51: #{tpu_custom_call.1} parent=39 // pred_region
          %308 = dma.done [#allocation7], 2048
        $region52: #{tpu_custom_call.1} parent=39 // pred_fallthru
          _
        // Predicated region
        $region53: #{tpu_custom_call.1} parent=39 // pred_check
          %p309 = pneg %p148
        $region54: #{tpu_custom_call.1} parent=39 // pred_check_branch
          %311 = sbr.rel (%p309) target = $region56
        $region55: #{tpu_custom_call.1} parent=39 // pred_region
          %312 = dma.done [#allocation10], 2048
        $region56: #{tpu_custom_call.1} parent=39 // pred_fallthru
          _
        %s313 = sand.u32 %s51, 1
        %s314 = scalar_lea.sflag [#allocation4], %s313
        %s315 = sand.u32 %s51, 1
        %s316 = smul.addr %s315, 128
        %s317 = scalar_lea.vmem [#allocation3], %s316
        %p318 = pneg %p64
        %p319 = pneg %p61
        %p320 = pneg %p85
        %p321 = pneg %p82
        %p322 = pneg %p106
        %p323 = pneg %p103
        %p324 = pneg %p127
        %p325 = pneg %p124
        %p326 = pneg %p148
        %p327 = pneg %p145
        %p328 = pneg %p174
        %p329 = pneg %p171
        %s330 = sand.u32 %s161, 1
        %s331 = scalar_lea.sflag [#allocation5], %s330
        %s332 = sand.u32 %s161, 1
        %s333 = smul.addr %s332, 128
        %s334 = scalar_lea.vmem [#allocation11], %s333
        %p335 = pneg %p200
        %p336 = pneg %p197
        %s337 = sand.u32 %s187, 1
        %s338 = scalar_lea.sflag [#allocation13], %s337
        %s339 = sand.u32 %s187, 1
        %s340 = smul.addr %s339, 64
        %s341 = scalar_lea.vmem [#allocation12], %s340
        %s342 = smul.u32 16, %s33
        %s343 = smul.u32 2, %s34
        %s344 = smul.u32 16, %s33
        %s345 = smul.u32 16, %s33
        %p347 = scmp.eq.s32.totalorder %s34, 0
        // Predicated region
        $region57: #{tpu_custom_call.1} parent=39 // pred_check
          %p348 = pneg %p347
        $region58: #{tpu_custom_call.1} parent=39 // pred_check_branch
          %350 = sbr.rel (%p348) target = $region60
        $region59: #{tpu_custom_call.1} parent=39 // pred_region
          %351 = vst [vmem:[#allocation2] sm:$0xff] 0.0
          %352 = vst [vmem:[#allocation2 + $0x8] sm:$0xff] 0.0
          %353 = vst [vmem:[#allocation2 + $0x10] sm:$0xff] 0.0
          %354 = vst [vmem:[#allocation2 + $0x18] sm:$0xff] 0.0
          %355 = vst [vmem:[#allocation2 + $0x20] sm:$0xff] 0.0
          %356 = vst [vmem:[#allocation2 + $0x28] sm:$0xff] 0.0
          %357 = vst [vmem:[#allocation2 + $0x30] sm:$0xff] 0.0
          %358 = vst [vmem:[#allocation2 + $0x38] sm:$0xff] 0.0
          %359 = vst [vmem:[#allocation2 + $0x40] sm:$0xff] 0.0
          %360 = vst [vmem:[#allocation2 + $0x48] sm:$0xff] 0.0
          %361 = vst [vmem:[#allocation2 + $0x50] sm:$0xff] 0.0
          %362 = vst [vmem:[#allocation2 + $0x58] sm:$0xff] 0.0
          %363 = vst [vmem:[#allocation2 + $0x60] sm:$0xff] 0.0
          %364 = vst [vmem:[#allocation2 + $0x68] sm:$0xff] 0.0
          %365 = vst [vmem:[#allocation2 + $0x70] sm:$0xff] 0.0
          %366 = vst [vmem:[#allocation2 + $0x78] sm:$0xff] 0.0
        $region60: #{tpu_custom_call.1} parent=39 // pred_fallthru
          _
        %s367 = smul.u32 %s34, 256
        %v368 = vld [vmem:[#allocation2] sm:$0xff]
        %v369 = vld [vmem:[#allocation2 + $0x8] sm:$0xff]
        %v370 = vld [vmem:[#allocation2 + $0x10] sm:$0xff]
        %v371 = vld [vmem:[#allocation2 + $0x18] sm:$0xff]
        %v372 = vld [vmem:[#allocation2 + $0x20] sm:$0xff]
        %v373 = vld [vmem:[#allocation2 + $0x28] sm:$0xff]
        %v374 = vld [vmem:[#allocation2 + $0x30] sm:$0xff]
        %v375 = vld [vmem:[#allocation2 + $0x38] sm:$0xff]
        %v376 = vld [vmem:[#allocation2 + $0x40] sm:$0xff]
        %v377 = vld [vmem:[#allocation2 + $0x48] sm:$0xff]
        %v378 = vld [vmem:[#allocation2 + $0x50] sm:$0xff]
        %v379 = vld [vmem:[#allocation2 + $0x58] sm:$0xff]
        %v380 = vld [vmem:[#allocation2 + $0x60] sm:$0xff]
        %v381 = vld [vmem:[#allocation2 + $0x68] sm:$0xff]
        %v382 = vld [vmem:[#allocation2 + $0x70] sm:$0xff]
        %v383 = vld [vmem:[#allocation2 + $0x78] sm:$0xff]
        %v384 = vld [vmem:[%s296] sm:$0xff]
        %v385 = vld [vmem:[%s296 + $0x8] sm:$0xff]
        %v386 = vld [vmem:[%s296 + $0x10] sm:$0xff]
        %v387 = vld [vmem:[%s296 + $0x18] sm:$0xff]
        %v388 = vld [vmem:[%s296 + $0x20] sm:$0xff]
        %v389 = vld [vmem:[%s296 + $0x28] sm:$0xff]
        %v390 = vld [vmem:[%s296 + $0x30] sm:$0xff]
        %v391 = vld [vmem:[%s296 + $0x38] sm:$0xff]
        %v392 = vld [vmem:[%s296 + $0x40] sm:$0xff]
        %v393 = vld [vmem:[%s296 + $0x48] sm:$0xff]
        %v394 = vld [vmem:[%s296 + $0x50] sm:$0xff]
        %v395 = vld [vmem:[%s296 + $0x58] sm:$0xff]
        %v396 = vld [vmem:[%s296 + $0x60] sm:$0xff]
        %v397 = vld [vmem:[%s296 + $0x68] sm:$0xff]
        %v398 = vld [vmem:[%s296 + $0x70] sm:$0xff]
        %v399 = vld [vmem:[%s296 + $0x78] sm:$0xff]
        %s400 = sshra.s32 %s367, 3
        %s401 = sand.u32 %s367, 7
        %s402 = smul.addr %s400, 4
        %s403 = scalar_lea.vmem [#allocation6], %s402
        %v404 = vld [vmem:[%s403] sm:$0xf]
        %v405 = vld [vmem:[%s403 + $0x4] sm:$0xf]
        %v406 = vld [vmem:[%s403 + $0x8] sm:$0xf]
        %v407 = vld [vmem:[%s403 + $0xc] sm:$0xf]
        %v408 = vld [vmem:[%s403 + $0x10] sm:$0xf]
        %v409 = vld [vmem:[%s403 + $0x14] sm:$0xf]
        %v410 = vld [vmem:[%s403 + $0x18] sm:$0xf]
        %v411 = vld [vmem:[%s403 + $0x1c] sm:$0xf]
        %v412 = vld [vmem:[%s403 + $0x20] sm:$0xf]
        %v413 = vld [vmem:[%s403 + $0x24] sm:$0xf]
        %v414 = vld [vmem:[%s403 + $0x28] sm:$0xf]
        %v415 = vld [vmem:[%s403 + $0x2c] sm:$0xf]
        %v416 = vld [vmem:[%s403 + $0x30] sm:$0xf]
        %v417 = vld [vmem:[%s403 + $0x34] sm:$0xf]
        %v418 = vld [vmem:[%s403 + $0x38] sm:$0xf]
        %v419 = vld [vmem:[%s403 + $0x3c] sm:$0xf]
        %v420 = vld [vmem:[%s403 + $0x40] sm:$0xf]
        %v421 = vld [vmem:[%s403 + $0x44] sm:$0xf]
        %v422 = vld [vmem:[%s403 + $0x48] sm:$0xf]
        %v423 = vld [vmem:[%s403 + $0x4c] sm:$0xf]
        %v424 = vld [vmem:[%s403 + $0x50] sm:$0xf]
        %v425 = vld [vmem:[%s403 + $0x54] sm:$0xf]
        %v426 = vld [vmem:[%s403 + $0x58] sm:$0xf]
        %v427 = vld [vmem:[%s403 + $0x5c] sm:$0xf]
        %v428 = vld [vmem:[%s403 + $0x60] sm:$0xf]
        %v429 = vld [vmem:[%s403 + $0x64] sm:$0xf]
        %v430 = vld [vmem:[%s403 + $0x68] sm:$0xf]
        %v431 = vld [vmem:[%s403 + $0x6c] sm:$0xf]
        %v432 = vld [vmem:[%s403 + $0x70] sm:$0xf]
        %v433 = vld [vmem:[%s403 + $0x74] sm:$0xf]
        %v434 = vld [vmem:[%s403 + $0x78] sm:$0xf]
        %v435 = vld [vmem:[%s403 + $0x7c] sm:$0xf]
        %v452 = vunpack.c.l.b16 %v384
        %v453 = vunpack.c.h.b16 %v384
        %v454 = vunpack.c.l.b16 %v385
        %v455 = vunpack.c.h.b16 %v385
        %v456 = vunpack.c.l.b16 %v386
        %v457 = vunpack.c.h.b16 %v386
        %v458 = vunpack.c.l.b16 %v387
        %v459 = vunpack.c.h.b16 %v387
        %v460 = vunpack.c.l.b16 %v388
        %v461 = vunpack.c.h.b16 %v388
        %v462 = vunpack.c.l.b16 %v389
        %v463 = vunpack.c.h.b16 %v389
        %v464 = vunpack.c.l.b16 %v390
        %v465 = vunpack.c.h.b16 %v390
        %v466 = vunpack.c.l.b16 %v391
        %v467 = vunpack.c.h.b16 %v391
        %v468 = vunpack.c.l.b16 %v392
        %v469 = vunpack.c.h.b16 %v392
        %v470 = vunpack.c.l.b16 %v393
        %v471 = vunpack.c.h.b16 %v393
        %v472 = vunpack.c.l.b16 %v394
        %v473 = vunpack.c.h.b16 %v394
        %v474 = vunpack.c.l.b16 %v395
        %v475 = vunpack.c.h.b16 %v395
        %v476 = vunpack.c.l.b16 %v396
        %v477 = vunpack.c.h.b16 %v396
        %v478 = vunpack.c.l.b16 %v397
        %v479 = vunpack.c.h.b16 %v397
        %v480 = vunpack.c.l.b16 %v398
        %v481 = vunpack.c.h.b16 %v398
        %v482 = vunpack.c.l.b16 %v399
        %v483 = vunpack.c.h.b16 %v399
        %v484 = vpack.c.b16 %v454, %v452
        %v485 = vpack.c.b16 %v455, %v453
        %v486 = vpack.c.b16 %v458, %v456
        %v487 = vpack.c.b16 %v459, %v457
        %v488 = vpack.c.b16 %v462, %v460
        %v489 = vpack.c.b16 %v463, %v461
        %v490 = vpack.c.b16 %v466, %v464
        %v491 = vpack.c.b16 %v467, %v465
        %v492 = vpack.c.b16 %v470, %v468
        %v493 = vpack.c.b16 %v471, %v469
        %v494 = vpack.c.b16 %v474, %v472
        %v495 = vpack.c.b16 %v475, %v473
        %v496 = vpack.c.b16 %v478, %v476
        %v497 = vpack.c.b16 %v479, %v477
        %v498 = vpack.c.b16 %v482, %v480
        %v499 = vpack.c.b16 %v483, %v481
        %v548 = vunpack.c.l.b16 %v404
        %v549 = vunpack.c.l.b16 %v405
        %v550 = vunpack.c.l.b16 %v406
        %v551 = vunpack.c.l.b16 %v407
        %v552 = vunpack.c.l.b16 %v408
        %v553 = vunpack.c.l.b16 %v409
        %v554 = vunpack.c.l.b16 %v410
        %v555 = vunpack.c.l.b16 %v411
        %v556 = vunpack.c.l.b16 %v412
        %v557 = vunpack.c.l.b16 %v413
        %v558 = vunpack.c.l.b16 %v414
        %v559 = vunpack.c.l.b16 %v415
        %v560 = vunpack.c.l.b16 %v416
        %v561 = vunpack.c.l.b16 %v417
        %v562 = vunpack.c.l.b16 %v418
        %v563 = vunpack.c.l.b16 %v419
        %v564 = vunpack.c.l.b16 %v420
        %v565 = vunpack.c.l.b16 %v421
        %v566 = vunpack.c.l.b16 %v422
        %v567 = vunpack.c.l.b16 %v423
        %v568 = vunpack.c.l.b16 %v424
        %v569 = vunpack.c.l.b16 %v425
        %v570 = vunpack.c.l.b16 %v426
        %v571 = vunpack.c.l.b16 %v427
        %v572 = vunpack.c.l.b16 %v428
        %v573 = vunpack.c.l.b16 %v429
        %v574 = vunpack.c.l.b16 %v430
        %v575 = vunpack.c.l.b16 %v431
        %v576 = vunpack.c.l.b16 %v432
        %v577 = vunpack.c.l.b16 %v433
        %v578 = vunpack.c.l.b16 %v434
        %v579 = vunpack.c.l.b16 %v435
        %v580 = vpack.c.b16 %v549, %v548
        %v581 = vpack.c.b16 %v551, %v550
        %v582 = vpack.c.b16 %v553, %v552
        %v583 = vpack.c.b16 %v555, %v554
        %v584 = vpack.c.b16 %v557, %v556
        %v585 = vpack.c.b16 %v559, %v558
        %v586 = vpack.c.b16 %v561, %v560
        %v587 = vpack.c.b16 %v563, %v562
        %v588 = vpack.c.b16 %v565, %v564
        %v589 = vpack.c.b16 %v567, %v566
        %v590 = vpack.c.b16 %v569, %v568
        %v591 = vpack.c.b16 %v571, %v570
        %v592 = vpack.c.b16 %v573, %v572
        %v593 = vpack.c.b16 %v575, %v574
        %v594 = vpack.c.b16 %v577, %v576
        %v595 = vpack.c.b16 %v579, %v578
        %612 = vmatprep.subr.bf16.mxu0 0
        %613 = vmatpush1.bf16.msra.mxu0 %v580
        %614 = vmatprep.subr.bf16.mxu0 0
        %615 = vmatpush1.bf16.msra.mxu0 %v581
        %616 = vmatprep.subr.bf16.mxu0 0
        %617 = vmatpush1.bf16.msra.mxu0 %v582
        %618 = vmatprep.subr.bf16.mxu0 0
        %619 = vmatpush1.bf16.msra.mxu0 %v583
        %620 = vmatprep.subr.bf16.mxu0 0
        %621 = vmatpush1.bf16.msra.mxu0 %v584
        %622 = vmatprep.subr.bf16.mxu0 0
        %623 = vmatpush1.bf16.msra.mxu0 %v585
        %624 = vmatprep.subr.bf16.mxu0 0
        %625 = vmatpush1.bf16.msra.mxu0 %v586
        %626 = vmatprep.subr.bf16.mxu0 0
        %627 = vmatpush1.bf16.msra.mxu0 %v587
        %628 = vmatprep.subr.bf16.mxu0 0
        %629 = vmatpush1.bf16.msra.mxu0 %v588
        %630 = vmatprep.subr.bf16.mxu0 0
        %631 = vmatpush1.bf16.msra.mxu0 %v589
        %632 = vmatprep.subr.bf16.mxu0 0
        %633 = vmatpush1.bf16.msra.mxu0 %v590
        %634 = vmatprep.subr.bf16.mxu0 0
        %635 = vmatpush1.bf16.msra.mxu0 %v591
        %636 = vmatprep.subr.bf16.mxu0 0
        %637 = vmatpush1.bf16.msra.mxu0 %v592
        %638 = vmatprep.subr.bf16.mxu0 0
        %639 = vmatpush1.bf16.msra.mxu0 %v593
        %640 = vmatprep.subr.bf16.mxu0 0
        %641 = vmatpush1.bf16.msra.mxu0 %v594
        %642 = vmatprep.subr.bf16.mxu0 0
        %643 = vmatpush1.bf16.msra.mxu0 %v595
        %644 = vmatprep.mubr.bf16.mxu0 %v485
        %645 = vmatmul.mubr.bf16.gmra.mrb[0].mxu0 %v484
        %v646 = vpop.f32.mrb[0].mxu0
        %v647 = vadd.f32 0.0, %v646
        %v648 = vpop.f32.mrb[0].mxu0
        %v649 = vpop.f32.mrb[0].mxu0
        %v650 = vadd.f32 0.0, %v649
        %v651 = vpop.f32.mrb[0].mxu0
        %652 = vmatprep.mubr.bf16.mxu0 %v487
        %653 = vmatmul.mubr.bf16.gmra.mrb[0].mxu0 %v486
        %v654 = vpop.f32.mrb[0].mxu0
        %v655 = vadd.f32 0.0, %v654
        %v656 = vpop.f32.mrb[0].mxu0
        %v657 = vpop.f32.mrb[0].mxu0
        %v658 = vadd.f32 0.0, %v657
        %v659 = vpop.f32.mrb[0].mxu0
        %660 = vmatprep.mubr.bf16.mxu0 %v489
        %661 = vmatmul.mubr.bf16.gmra.mrb[0].mxu0 %v488
        %v662 = vpop.f32.mrb[0].mxu0
        %v663 = vadd.f32 0.0, %v662
        %v664 = vpop.f32.mrb[0].mxu0
        %v665 = vpop.f32.mrb[0].mxu0
        %v666 = vadd.f32 0.0, %v665
        %v667 = vpop.f32.mrb[0].mxu0
        %668 = vmatprep.mubr.bf16.mxu0 %v491
        %669 = vmatmul.mubr.bf16.gmra.mrb[0].mxu0 %v490
        %v670 = vpop.f32.mrb[0].mxu0
        %v671 = vadd.f32 0.0, %v670
        %v672 = vpop.f32.mrb[0].mxu0
        %v673 = vpop.f32.mrb[0].mxu0
        %v674 = vadd.f32 0.0, %v673
        %v675 = vpop.f32.mrb[0].mxu0
        %676 = vmatprep.mubr.bf16.mxu0 %v493
        %677 = vmatmul.mubr.bf16.gmra.mrb[0].mxu0 %v492
        %v678 = vpop.f32.mrb[0].mxu0
        %v679 = vadd.f32 0.0, %v678
        %v680 = vpop.f32.mrb[0].mxu0
        %v681 = vpop.f32.mrb[0].mxu0
        %v682 = vadd.f32 0.0, %v681
        %v683 = vpop.f32.mrb[0].mxu0
        %684 = vmatprep.mubr.bf16.mxu0 %v495
        %685 = vmatmul.mubr.bf16.gmra.mrb[0].mxu0 %v494
        %v686 = vpop.f32.mrb[0].mxu0
        %v687 = vadd.f32 0.0, %v686
        %v688 = vpop.f32.mrb[0].mxu0
        %v689 = vpop.f32.mrb[0].mxu0
        %v690 = vadd.f32 0.0, %v689
        %v691 = vpop.f32.mrb[0].mxu0
        %692 = vmatprep.mubr.bf16.mxu0 %v497
        %693 = vmatmul.mubr.bf16.gmra.mrb[0].mxu0 %v496
        %v694 = vpop.f32.mrb[0].mxu0
        %v695 = vadd.f32 0.0, %v694
        %v696 = vpop.f32.mrb[0].mxu0
        %v697 = vpop.f32.mrb[0].mxu0
        %v698 = vadd.f32 0.0, %v697
        %v699 = vpop.f32.mrb[0].mxu0
        %700 = vmatprep.mubr.bf16.mxu0 %v499
        %701 = vmatmul.mubr.bf16.gmra.mrb[0].mxu0 %v498
        %v702 = vpop.f32.mrb[0].mxu0
        %v703 = vadd.f32 0.0, %v702
        %v704 = vpop.f32.mrb[0].mxu0
        %v705 = vpop.f32.mrb[0].mxu0
        %v706 = vadd.f32 0.0, %v705
        %v707 = vpop.f32.mrb[0].mxu0
        %708 = vdwg.mxu0
        %v709 = vadd.f32 %v368, %v647
        %v710 = vadd.f32 %v369, %v650
        %v711 = vadd.f32 %v370, %v655
        %v712 = vadd.f32 %v371, %v658
        %v713 = vadd.f32 %v372, %v663
        %v714 = vadd.f32 %v373, %v666
        %v715 = vadd.f32 %v374, %v671
        %v716 = vadd.f32 %v375, %v674
        %v717 = vadd.f32 %v376, %v679
        %v718 = vadd.f32 %v377, %v682
        %v719 = vadd.f32 %v378, %v687
        %v720 = vadd.f32 %v379, %v690
        %v721 = vadd.f32 %v380, %v695
        %v722 = vadd.f32 %v381, %v698
        %v723 = vadd.f32 %v382, %v703
        %v724 = vadd.f32 %v383, %v706
        %725 = vst [vmem:[#allocation2] sm:$0xff] %v709
        %726 = vst [vmem:[#allocation2 + $0x8] sm:$0xff] %v710
        %727 = vst [vmem:[#allocation2 + $0x10] sm:$0xff] %v711
        %728 = vst [vmem:[#allocation2 + $0x18] sm:$0xff] %v712
        %729 = vst [vmem:[#allocation2 + $0x20] sm:$0xff] %v713
        %730 = vst [vmem:[#allocation2 + $0x28] sm:$0xff] %v714
        %731 = vst [vmem:[#allocation2 + $0x30] sm:$0xff] %v715
        %732 = vst [vmem:[#allocation2 + $0x38] sm:$0xff] %v716
        %733 = vst [vmem:[#allocation2 + $0x40] sm:$0xff] %v717
        %734 = vst [vmem:[#allocation2 + $0x48] sm:$0xff] %v718
        %735 = vst [vmem:[#allocation2 + $0x50] sm:$0xff] %v719
        %736 = vst [vmem:[#allocation2 + $0x58] sm:$0xff] %v720
        %737 = vst [vmem:[#allocation2 + $0x60] sm:$0xff] %v721
        %738 = vst [vmem:[#allocation2 + $0x68] sm:$0xff] %v722
        %739 = vst [vmem:[#allocation2 + $0x70] sm:$0xff] %v723
        %740 = vst [vmem:[#allocation2 + $0x78] sm:$0xff] %v724
        // Predicated region
        $region61: #{tpu_custom_call.1} parent=39 // pred_check
          %p741 = pneg %p347
        $region62: #{tpu_custom_call.1} parent=39 // pred_check_branch
          %743 = sbr.rel (%p741) target = $region64
        $region63: #{tpu_custom_call.1} parent=39 // pred_region
          %v744 = vld [vmem:[#allocation2] sm:$0xff]
          %v745 = vld [vmem:[#allocation2 + $0x8] sm:$0xff]
          %v746 = vld [vmem:[#allocation2 + $0x10] sm:$0xff]
          %v747 = vld [vmem:[#allocation2 + $0x18] sm:$0xff]
          %v748 = vld [vmem:[#allocation2 + $0x20] sm:$0xff]
          %v749 = vld [vmem:[#allocation2 + $0x28] sm:$0xff]
          %v750 = vld [vmem:[#allocation2 + $0x30] sm:$0xff]
          %v751 = vld [vmem:[#allocation2 + $0x38] sm:$0xff]
          %v752 = vld [vmem:[#allocation2 + $0x40] sm:$0xff]
          %v753 = vld [vmem:[#allocation2 + $0x48] sm:$0xff]
          %v754 = vld [vmem:[#allocation2 + $0x50] sm:$0xff]
          %v755 = vld [vmem:[#allocation2 + $0x58] sm:$0xff]
          %v756 = vld [vmem:[#allocation2 + $0x60] sm:$0xff]
          %v757 = vld [vmem:[#allocation2 + $0x68] sm:$0xff]
          %v758 = vld [vmem:[#allocation2 + $0x70] sm:$0xff]
          %v759 = vld [vmem:[#allocation2 + $0x78] sm:$0xff]
          %v760 = vld [vmem:[#allocation8] sm:$0xff]
          %v761 = vld [vmem:[#allocation8 + $0x8] sm:$0xff]
          %v762 = vld [vmem:[#allocation8 + $0x10] sm:$0xff]
          %v763 = vld [vmem:[#allocation8 + $0x18] sm:$0xff]
          %v764 = vld [vmem:[#allocation8 + $0x20] sm:$0xff]
          %v765 = vld [vmem:[#allocation8 + $0x28] sm:$0xff]
          %v766 = vld [vmem:[#allocation8 + $0x30] sm:$0xff]
          %v767 = vld [vmem:[#allocation8 + $0x38] sm:$0xff]
          %v768 = vld [vmem:[#allocation8 + $0x40] sm:$0xff]
          %v769 = vld [vmem:[#allocation8 + $0x48] sm:$0xff]
          %v770 = vld [vmem:[#allocation8 + $0x50] sm:$0xff]
          %v771 = vld [vmem:[#allocation8 + $0x58] sm:$0xff]
          %v772 = vld [vmem:[#allocation8 + $0x60] sm:$0xff]
          %v773 = vld [vmem:[#allocation8 + $0x68] sm:$0xff]
          %v774 = vld [vmem:[#allocation8 + $0x70] sm:$0xff]
          %v775 = vld [vmem:[#allocation8 + $0x78] sm:$0xff]
          %v776 = vld [vmem:[%s3] sm:$0x1]
          %v778 = vlaneseq
          %v779 = vshrl.u32 %v778, 7
          %v780 = vsub.s32 0, %v779
          %v781 = vrot.slane %v776, %v780
          %783 = vmatprep.subr.mxu0 0.0
          %784 = vmatpush1.msra.mxu0 %v760
          %785 = vmatprep.subr.mxu0 0.0
          %786 = vmatpush1.msra.mxu0 %v761
          %787 = vmatprep.subr.mxu0 0.0
          %788 = vmatpush1.msra.mxu0 %v762
          %789 = vmatprep.subr.mxu0 0.0
          %790 = vmatpush1.msra.mxu0 %v763
          %791 = vmatprep.subr.mxu0 0.0
          %792 = vmatpush1.msra.mxu0 %v764
          %793 = vmatprep.subr.mxu0 0.0
          %794 = vmatpush1.msra.mxu0 %v765
          %795 = vmatprep.subr.mxu0 0.0
          %796 = vmatpush1.msra.mxu0 %v766
          %797 = vmatprep.subr.mxu0 0.0
          %798 = vmatpush1.msra.mxu0 %v767
          %799 = vmatprep.subr.mxu0 0.0
          %800 = vmatpush1.msra.mxu0 %v768
          %801 = vmatprep.subr.mxu0 0.0
          %802 = vmatpush1.msra.mxu0 %v769
          %803 = vmatprep.subr.mxu0 0.0
          %804 = vmatpush1.msra.mxu0 %v770
          %805 = vmatprep.subr.mxu0 0.0
          %806 = vmatpush1.msra.mxu0 %v771
          %807 = vmatprep.subr.mxu0 0.0
          %808 = vmatpush1.msra.mxu0 %v772
          %809 = vmatprep.subr.mxu0 0.0
          %810 = vmatpush1.msra.mxu0 %v773
          %811 = vmatprep.subr.mxu0 0.0
          %812 = vmatpush1.msra.mxu0 %v774
          %813 = vmatprep.subr.mxu0 0.0
          %814 = vmatpush1.msra.mxu0 %v775
          %815 = vmatprep.subr.mxu0 0.0
          %816 = vmatpush1.msra.mxu0 0.0
          %817 = vmatprep.subr.mxu0 0.0
          %818 = vmatpush1.msra.mxu0 0.0
          %819 = vmatprep.subr.mxu0 0.0
          %820 = vmatpush1.msra.mxu0 0.0
          %821 = vmatprep.subr.mxu0 0.0
          %822 = vmatpush1.msra.mxu0 0.0
          %823 = vmatprep.subr.mxu0 0.0
          %824 = vmatpush1.msra.mxu0 0.0
          %825 = vmatprep.subr.mxu0 0.0
          %826 = vmatpush1.msra.mxu0 0.0
          %827 = vmatprep.subr.mxu0 0.0
          %828 = vmatpush1.msra.mxu0 0.0
          %829 = vmatprep.subr.mxu0 0.0
          %830 = vmatpush1.msra.mxu0 0.0
          %831 = vmatprep.subr.mxu0 0.0
          %832 = vmatpush1.msra.mxu0 0.0
          %833 = vmatprep.subr.mxu0 0.0
          %834 = vmatpush1.msra.mxu0 0.0
          %835 = vmatprep.subr.mxu0 0.0
          %836 = vmatpush1.msra.mxu0 0.0
          %837 = vmatprep.subr.mxu0 0.0
          %838 = vmatpush1.msra.mxu0 0.0
          %839 = vmatprep.subr.mxu0 0.0
          %840 = vmatpush1.msra.mxu0 0.0
          %841 = vmatprep.subr.mxu0 0.0
          %842 = vmatpush1.msra.mxu0 0.0
          %843 = vmatprep.subr.mxu0 0.0
          %844 = vmatpush1.msra.mxu0 0.0
          %845 = vmatprep.subr.mxu0 0.0
          %846 = vmatpush1.msra.mxu0 0.0
          %847 = vmatprep.mubr.f32.mxu0 0.0
          %848 = vmatmul.mubr.f32.gmra.mrb[0].mxu0 %v744
          %v849 = vpop.f32.mrb[0].mxu0
          %v850 = vadd.f32 %v781, %v849
          %v851 = vpop.f32.mrb[0].mxu0
          %852 = vmatprep.mubr.f32.mxu0 0.0
          %853 = vmatmul.mubr.f32.gmra.mrb[0].mxu0 %v745
          %v854 = vpop.f32.mrb[0].mxu0
          %v855 = vadd.f32 %v781, %v854
          %v856 = vpop.f32.mrb[0].mxu0
          %857 = vmatprep.mubr.f32.mxu0 0.0
          %858 = vmatmul.mubr.f32.gmra.mrb[0].mxu0 %v746
          %v859 = vpop.f32.mrb[0].mxu0
          %v860 = vadd.f32 %v781, %v859
          %v861 = vpop.f32.mrb[0].mxu0
          %862 = vmatprep.mubr.f32.mxu0 0.0
          %863 = vmatmul.mubr.f32.gmra.mrb[0].mxu0 %v747
          %v864 = vpop.f32.mrb[0].mxu0
          %v865 = vadd.f32 %v781, %v864
          %v866 = vpop.f32.mrb[0].mxu0
          %867 = vmatprep.mubr.f32.mxu0 0.0
          %868 = vmatmul.mubr.f32.gmra.mrb[0].mxu0 %v748
          %v869 = vpop.f32.mrb[0].mxu0
          %v870 = vadd.f32 %v781, %v869
          %v871 = vpop.f32.mrb[0].mxu0
          %872 = vmatprep.mubr.f32.mxu0 0.0
          %873 = vmatmul.mubr.f32.gmra.mrb[0].mxu0 %v749
          %v874 = vpop.f32.mrb[0].mxu0
          %v875 = vadd.f32 %v781, %v874
          %v876 = vpop.f32.mrb[0].mxu0
          %877 = vmatprep.mubr.f32.mxu0 0.0
          %878 = vmatmul.mubr.f32.gmra.mrb[0].mxu0 %v750
          %v879 = vpop.f32.mrb[0].mxu0
          %v880 = vadd.f32 %v781, %v879
          %v881 = vpop.f32.mrb[0].mxu0
          %882 = vmatprep.mubr.f32.mxu0 0.0
          %883 = vmatmul.mubr.f32.gmra.mrb[0].mxu0 %v751
          %v884 = vpop.f32.mrb[0].mxu0
          %v885 = vadd.f32 %v781, %v884
          %v886 = vpop.f32.mrb[0].mxu0
          %887 = vmatprep.mubr.f32.mxu0 0.0
          %888 = vmatmul.mubr.f32.gmra.mrb[0].mxu0 %v752
          %v889 = vpop.f32.mrb[0].mxu0
          %v890 = vadd.f32 %v781, %v889
          %v891 = vpop.f32.mrb[0].mxu0
          %892 = vmatprep.mubr.f32.mxu0 0.0
          %893 = vmatmul.mubr.f32.gmra.mrb[0].mxu0 %v753
          %v894 = vpop.f32.mrb[0].mxu0
          %v895 = vadd.f32 %v781, %v894
          %v896 = vpop.f32.mrb[0].mxu0
          %897 = vmatprep.mubr.f32.mxu0 0.0
          %898 = vmatmul.mubr.f32.gmra.mrb[0].mxu0 %v754
          %v899 = vpop.f32.mrb[0].mxu0
          %v900 = vadd.f32 %v781, %v899
          %v901 = vpop.f32.mrb[0].mxu0
          %902 = vmatprep.mubr.f32.mxu0 0.0
          %903 = vmatmul.mubr.f32.gmra.mrb[0].mxu0 %v755
          %v904 = vpop.f32.mrb[0].mxu0
          %v905 = vadd.f32 %v781, %v904
          %v906 = vpop.f32.mrb[0].mxu0
          %907 = vmatprep.mubr.f32.mxu0 0.0
          %908 = vmatmul.mubr.f32.gmra.mrb[0].mxu0 %v756
          %v909 = vpop.f32.mrb[0].mxu0
          %v910 = vadd.f32 %v781, %v909
          %v911 = vpop.f32.mrb[0].mxu0
          %912 = vmatprep.mubr.f32.mxu0 0.0
          %913 = vmatmul.mubr.f32.gmra.mrb[0].mxu0 %v757
          %v914 = vpop.f32.mrb[0].mxu0
          %v915 = vadd.f32 %v781, %v914
          %v916 = vpop.f32.mrb[0].mxu0
          %917 = vmatprep.mubr.f32.mxu0 0.0
          %918 = vmatmul.mubr.f32.gmra.mrb[0].mxu0 %v758
          %v919 = vpop.f32.mrb[0].mxu0
          %v920 = vadd.f32 %v781, %v919
          %v921 = vpop.f32.mrb[0].mxu0
          %922 = vmatprep.mubr.f32.mxu0 0.0
          %923 = vmatmul.mubr.f32.gmra.mrb[0].mxu0 %v759
          %v924 = vpop.f32.mrb[0].mxu0
          %v925 = vadd.f32 %v781, %v924
          %v926 = vpop.f32.mrb[0].mxu0
          %927 = vdwg.mxu0
          %v928 = vmax.f32 %v850, 0.0
          %v929 = vmax.f32 %v855, 0.0
          %v930 = vmax.f32 %v860, 0.0
          %v931 = vmax.f32 %v865, 0.0
          %v932 = vmax.f32 %v870, 0.0
          %v933 = vmax.f32 %v875, 0.0
          %v934 = vmax.f32 %v880, 0.0
          %v935 = vmax.f32 %v885, 0.0
          %v936 = vmax.f32 %v890, 0.0
          %v937 = vmax.f32 %v895, 0.0
          %v938 = vmax.f32 %v900, 0.0
          %v939 = vmax.f32 %v905, 0.0
          %v940 = vmax.f32 %v910, 0.0
          %v941 = vmax.f32 %v915, 0.0
          %v942 = vmax.f32 %v920, 0.0
          %v943 = vmax.f32 %v925, 0.0
          %944 = vst [vmem:[%s334] sm:$0xff] %v928
          %945 = vst [vmem:[%s334 + $0x8] sm:$0xff] %v929
          %946 = vst [vmem:[%s334 + $0x10] sm:$0xff] %v930
          %947 = vst [vmem:[%s334 + $0x18] sm:$0xff] %v931
          %948 = vst [vmem:[%s334 + $0x20] sm:$0xff] %v932
          %949 = vst [vmem:[%s334 + $0x28] sm:$0xff] %v933
          %950 = vst [vmem:[%s334 + $0x30] sm:$0xff] %v934
          %951 = vst [vmem:[%s334 + $0x38] sm:$0xff] %v935
          %952 = vst [vmem:[%s334 + $0x40] sm:$0xff] %v936
          %953 = vst [vmem:[%s334 + $0x48] sm:$0xff] %v937
          %954 = vst [vmem:[%s334 + $0x50] sm:$0xff] %v938
          %955 = vst [vmem:[%s334 + $0x58] sm:$0xff] %v939
          %956 = vst [vmem:[%s334 + $0x60] sm:$0xff] %v940
          %957 = vst [vmem:[%s334 + $0x68] sm:$0xff] %v941
          %958 = vst [vmem:[%s334 + $0x70] sm:$0xff] %v942
          %959 = vst [vmem:[%s334 + $0x78] sm:$0xff] %v943
          %v960 = vld [vmem:[#allocation9] sm:$0xff]
          %v961 = vld [vmem:[#allocation9 + $0x8] sm:$0xff]
          %v962 = vld [vmem:[#allocation9 + $0x10] sm:$0xff]
          %v963 = vld [vmem:[#allocation9 + $0x18] sm:$0xff]
          %v964 = vld [vmem:[#allocation9 + $0x20] sm:$0xff]
          %v965 = vld [vmem:[#allocation9 + $0x28] sm:$0xff]
          %v966 = vld [vmem:[#allocation9 + $0x30] sm:$0xff]
          %v967 = vld [vmem:[#allocation9 + $0x38] sm:$0xff]
          %v968 = vld [vmem:[#allocation9 + $0x40] sm:$0xff]
          %v969 = vld [vmem:[#allocation9 + $0x48] sm:$0xff]
          %v970 = vld [vmem:[#allocation9 + $0x50] sm:$0xff]
          %v971 = vld [vmem:[#allocation9 + $0x58] sm:$0xff]
          %v972 = vld [vmem:[#allocation9 + $0x60] sm:$0xff]
          %v973 = vld [vmem:[#allocation9 + $0x68] sm:$0xff]
          %v974 = vld [vmem:[#allocation9 + $0x70] sm:$0xff]
          %v975 = vld [vmem:[#allocation9 + $0x78] sm:$0xff]
          %976 = vmatprep.subr.mxu0 0.0
          %977 = vmatpush1.msra.mxu0 %v960
          %978 = vmatprep.subr.mxu0 0.0
          %979 = vmatpush1.msra.mxu0 %v961
          %980 = vmatprep.subr.mxu0 0.0
          %981 = vmatpush1.msra.mxu0 %v962
          %982 = vmatprep.subr.mxu0 0.0
          %983 = vmatpush1.msra.mxu0 %v963
          %984 = vmatprep.subr.mxu0 0.0
          %985 = vmatpush1.msra.mxu0 %v964
          %986 = vmatprep.subr.mxu0 0.0
          %987 = vmatpush1.msra.mxu0 %v965
          %988 = vmatprep.subr.mxu0 0.0
          %989 = vmatpush1.msra.mxu0 %v966
          %990 = vmatprep.subr.mxu0 0.0
          %991 = vmatpush1.msra.mxu0 %v967
          %992 = vmatprep.subr.mxu0 0.0
          %993 = vmatpush1.msra.mxu0 %v968
          %994 = vmatprep.subr.mxu0 0.0
          %995 = vmatpush1.msra.mxu0 %v969
          %996 = vmatprep.subr.mxu0 0.0
          %997 = vmatpush1.msra.mxu0 %v970
          %998 = vmatprep.subr.mxu0 0.0
          %999 = vmatpush1.msra.mxu0 %v971
          %1000 = vmatprep.subr.mxu0 0.0
          %1001 = vmatpush1.msra.mxu0 %v972
          %1002 = vmatprep.subr.mxu0 0.0
          %1003 = vmatpush1.msra.mxu0 %v973
          %1004 = vmatprep.subr.mxu0 0.0
          %1005 = vmatpush1.msra.mxu0 %v974
          %1006 = vmatprep.subr.mxu0 0.0
          %1007 = vmatpush1.msra.mxu0 %v975
          %1008 = vmatprep.subr.mxu0 0.0
          %1009 = vmatpush1.msra.mxu0 0.0
          %1010 = vmatprep.subr.mxu0 0.0
          %1011 = vmatpush1.msra.mxu0 0.0
          %1012 = vmatprep.subr.mxu0 0.0
          %1013 = vmatpush1.msra.mxu0 0.0
          %1014 = vmatprep.subr.mxu0 0.0
          %1015 = vmatpush1.msra.mxu0 0.0
          %1016 = vmatprep.subr.mxu0 0.0
          %1017 = vmatpush1.msra.mxu0 0.0
          %1018 = vmatprep.subr.mxu0 0.0
          %1019 = vmatpush1.msra.mxu0 0.0
          %1020 = vmatprep.subr.mxu0 0.0
          %1021 = vmatpush1.msra.mxu0 0.0
          %1022 = vmatprep.subr.mxu0 0.0
          %1023 = vmatpush1.msra.mxu0 0.0
          %1024 = vmatprep.subr.mxu0 0.0
          %1025 = vmatpush1.msra.mxu0 0.0
          %1026 = vmatprep.subr.mxu0 0.0
          %1027 = vmatpush1.msra.mxu0 0.0
          %1028 = vmatprep.subr.mxu0 0.0
          %1029 = vmatpush1.msra.mxu0 0.0
          %1030 = vmatprep.subr.mxu0 0.0
          %1031 = vmatpush1.msra.mxu0 0.0
          %1032 = vmatprep.subr.mxu0 0.0
          %1033 = vmatpush1.msra.mxu0 0.0
          %1034 = vmatprep.subr.mxu0 0.0
          %1035 = vmatpush1.msra.mxu0 0.0
          %1036 = vmatprep.subr.mxu0 0.0
          %1037 = vmatpush1.msra.mxu0 0.0
          %1038 = vmatprep.subr.mxu0 0.0
          %1039 = vmatpush1.msra.mxu0 0.0
          %1040 = vmatprep.mubr.f32.mxu0 0.0
          %1041 = vmatmul.mubr.f32.gmra.mrb[0].mxu0 %v928
          %v1042 = vpop.f32.mrb[0].mxu0
          %v1043 = vadd.f32 0.0, %v1042
          %v1044 = vpop.f32.mrb[0].mxu0
          %1045 = vmatprep.mubr.f32.mxu0 0.0
          %1046 = vmatmul.mubr.f32.gmra.mrb[0].mxu0 %v929
          %v1047 = vpop.f32.mrb[0].mxu0
          %v1048 = vadd.f32 0.0, %v1047
          %v1049 = vpop.f32.mrb[0].mxu0
          %1050 = vmatprep.mubr.f32.mxu0 0.0
          %1051 = vmatmul.mubr.f32.gmra.mrb[0].mxu0 %v930
          %v1052 = vpop.f32.mrb[0].mxu0
          %v1053 = vadd.f32 0.0, %v1052
          %v1054 = vpop.f32.mrb[0].mxu0
          %1055 = vmatprep.mubr.f32.mxu0 0.0
          %1056 = vmatmul.mubr.f32.gmra.mrb[0].mxu0 %v931
          %v1057 = vpop.f32.mrb[0].mxu0
          %v1058 = vadd.f32 0.0, %v1057
          %v1059 = vpop.f32.mrb[0].mxu0
          %1060 = vmatprep.mubr.f32.mxu0 0.0
          %1061 = vmatmul.mubr.f32.gmra.mrb[0].mxu0 %v932
          %v1062 = vpop.f32.mrb[0].mxu0
          %v1063 = vadd.f32 0.0, %v1062
          %v1064 = vpop.f32.mrb[0].mxu0
          %1065 = vmatprep.mubr.f32.mxu0 0.0
          %1066 = vmatmul.mubr.f32.gmra.mrb[0].mxu0 %v933
          %v1067 = vpop.f32.mrb[0].mxu0
          %v1068 = vadd.f32 0.0, %v1067
          %v1069 = vpop.f32.mrb[0].mxu0
          %1070 = vmatprep.mubr.f32.mxu0 0.0
          %1071 = vmatmul.mubr.f32.gmra.mrb[0].mxu0 %v934
          %v1072 = vpop.f32.mrb[0].mxu0
          %v1073 = vadd.f32 0.0, %v1072
          %v1074 = vpop.f32.mrb[0].mxu0
          %1075 = vmatprep.mubr.f32.mxu0 0.0
          %1076 = vmatmul.mubr.f32.gmra.mrb[0].mxu0 %v935
          %v1077 = vpop.f32.mrb[0].mxu0
          %v1078 = vadd.f32 0.0, %v1077
          %v1079 = vpop.f32.mrb[0].mxu0
          %1080 = vmatprep.mubr.f32.mxu0 0.0
          %1081 = vmatmul.mubr.f32.gmra.mrb[0].mxu0 %v936
          %v1082 = vpop.f32.mrb[0].mxu0
          %v1083 = vadd.f32 0.0, %v1082
          %v1084 = vpop.f32.mrb[0].mxu0
          %1085 = vmatprep.mubr.f32.mxu0 0.0
          %1086 = vmatmul.mubr.f32.gmra.mrb[0].mxu0 %v937
          %v1087 = vpop.f32.mrb[0].mxu0
          %v1088 = vadd.f32 0.0, %v1087
          %v1089 = vpop.f32.mrb[0].mxu0
          %1090 = vmatprep.mubr.f32.mxu0 0.0
          %1091 = vmatmul.mubr.f32.gmra.mrb[0].mxu0 %v938
          %v1092 = vpop.f32.mrb[0].mxu0
          %v1093 = vadd.f32 0.0, %v1092
          %v1094 = vpop.f32.mrb[0].mxu0
          %1095 = vmatprep.mubr.f32.mxu0 0.0
          %1096 = vmatmul.mubr.f32.gmra.mrb[0].mxu0 %v939
          %v1097 = vpop.f32.mrb[0].mxu0
          %v1098 = vadd.f32 0.0, %v1097
          %v1099 = vpop.f32.mrb[0].mxu0
          %1100 = vmatprep.mubr.f32.mxu0 0.0
          %1101 = vmatmul.mubr.f32.gmra.mrb[0].mxu0 %v940
          %v1102 = vpop.f32.mrb[0].mxu0
          %v1103 = vadd.f32 0.0, %v1102
          %v1104 = vpop.f32.mrb[0].mxu0
          %1105 = vmatprep.mubr.f32.mxu0 0.0
          %1106 = vmatmul.mubr.f32.gmra.mrb[0].mxu0 %v941
          %v1107 = vpop.f32.mrb[0].mxu0
          %v1108 = vadd.f32 0.0, %v1107
          %v1109 = vpop.f32.mrb[0].mxu0
          %1110 = vmatprep.mubr.f32.mxu0 0.0
          %1111 = vmatmul.mubr.f32.gmra.mrb[0].mxu0 %v942
          %v1112 = vpop.f32.mrb[0].mxu0
          %v1113 = vadd.f32 0.0, %v1112
          %v1114 = vpop.f32.mrb[0].mxu0
          %1115 = vmatprep.mubr.f32.mxu0 0.0
          %1116 = vmatmul.mubr.f32.gmra.mrb[0].mxu0 %v943
          %v1117 = vpop.f32.mrb[0].mxu0
          %v1118 = vadd.f32 0.0, %v1117
          %v1119 = vpop.f32.mrb[0].mxu0
          %1120 = vdwg.mxu0
          %v1121 = vpack.c.bf16 %v1048, %v1043
          %v1122 = vpack.c.bf16 %v1058, %v1053
          %v1123 = vpack.c.bf16 %v1068, %v1063
          %v1124 = vpack.c.bf16 %v1078, %v1073
          %v1125 = vpack.c.bf16 %v1088, %v1083
          %v1126 = vpack.c.bf16 %v1098, %v1093
          %v1127 = vpack.c.bf16 %v1108, %v1103
          %v1128 = vpack.c.bf16 %v1118, %v1113
          %v1137 = vunpack.c.l.b16 %v1121
          %v1138 = vunpack.c.h.b16 %v1121
          %v1139 = vunpack.c.l.b16 %v1122
          %v1140 = vunpack.c.h.b16 %v1122
          %v1141 = vunpack.c.l.b16 %v1123
          %v1142 = vunpack.c.h.b16 %v1123
          %v1143 = vunpack.c.l.b16 %v1124
          %v1144 = vunpack.c.h.b16 %v1124
          %v1145 = vunpack.c.l.b16 %v1125
          %v1146 = vunpack.c.h.b16 %v1125
          %v1147 = vunpack.c.l.b16 %v1126
          %v1148 = vunpack.c.h.b16 %v1126
          %v1149 = vunpack.c.l.b16 %v1127
          %v1150 = vunpack.c.h.b16 %v1127
          %v1151 = vunpack.c.l.b16 %v1128
          %v1152 = vunpack.c.h.b16 %v1128
          %v1153 = vpack.c.b16 %v1137, %v1137
          %v1154 = vpack.c.b16 %v1138, %v1138
          %v1155 = vpack.c.b16 %v1139, %v1139
          %v1156 = vpack.c.b16 %v1140, %v1140
          %v1157 = vpack.c.b16 %v1141, %v1141
          %v1158 = vpack.c.b16 %v1142, %v1142
          %v1159 = vpack.c.b16 %v1143, %v1143
          %v1160 = vpack.c.b16 %v1144, %v1144
          %v1161 = vpack.c.b16 %v1145, %v1145
          %v1162 = vpack.c.b16 %v1146, %v1146
          %v1163 = vpack.c.b16 %v1147, %v1147
          %v1164 = vpack.c.b16 %v1148, %v1148
          %v1165 = vpack.c.b16 %v1149, %v1149
          %v1166 = vpack.c.b16 %v1150, %v1150
          %v1167 = vpack.c.b16 %v1151, %v1151
          %v1168 = vpack.c.b16 %v1152, %v1152
          %1185 = vst [vmem:[%s341] sm:$0xf] %v1153
          %1186 = vst [vmem:[%s341 + $0x4] sm:$0xf] %v1154
          %1187 = vst [vmem:[%s341 + $0x8] sm:$0xf] %v1155
          %1188 = vst [vmem:[%s341 + $0xc] sm:$0xf] %v1156
          %1189 = vst [vmem:[%s341 + $0x10] sm:$0xf] %v1157
          %1190 = vst [vmem:[%s341 + $0x14] sm:$0xf] %v1158
          %1191 = vst [vmem:[%s341 + $0x18] sm:$0xf] %v1159
          %1192 = vst [vmem:[%s341 + $0x1c] sm:$0xf] %v1160
          %1193 = vst [vmem:[%s341 + $0x20] sm:$0xf] %v1161
          %1194 = vst [vmem:[%s341 + $0x24] sm:$0xf] %v1162
          %1195 = vst [vmem:[%s341 + $0x28] sm:$0xf] %v1163
          %1196 = vst [vmem:[%s341 + $0x2c] sm:$0xf] %v1164
          %1197 = vst [vmem:[%s341 + $0x30] sm:$0xf] %v1165
          %1198 = vst [vmem:[%s341 + $0x34] sm:$0xf] %v1166
          %1199 = vst [vmem:[%s341 + $0x38] sm:$0xf] %v1167
          %1200 = vst [vmem:[%s341 + $0x3c] sm:$0xf] %v1168
        $region64: #{tpu_custom_call.1} parent=39 // pred_fallthru
          _
        %s1201 = sand.u32 %s161, 1
        %s1202 = scalar_lea.sflag [#allocation5], %s1201
        %s1203 = sand.u32 %s161, 1
        %s1204 = smul.addr %s1203, 128
        %s1205 = scalar_lea.vmem [#allocation11], %s1204
        %s1206 = sand.u32 %s187, 1
        %s1207 = scalar_lea.sflag [#allocation13], %s1206
        %s1208 = sand.u32 %s187, 1
        %s1209 = smul.addr %s1208, 64
        %s1210 = scalar_lea.vmem [#allocation12], %s1209
        // Predicated region
        $region65: #{tpu_custom_call.1} parent=39 // pred_check
          %p1211 = pneg %p171
        $region66: #{tpu_custom_call.1} parent=39 // pred_check_branch
          %1213 = sbr.rel (%p1211) target = $region68
        $region67: #{tpu_custom_call.1} parent=39 // pred_region
          %s1214 = smul.u32 16, %s33
          %s1216 = ssub.s32 2048, 2048
          %1217 = vsyncadd %s1202, %s1216
          %s1218 = smul.addr %s1214, 128
          %s1219 = scalar_lea.hbm %s5, %s1218
          %s1220 = sshll.u32 %s1205, 4
          %s1221 = int_to_ptr.vmem [resolvable:$true] %s1220
          %1226 = dma.vmem_to_hbm [thread:$0]  %s1221, 2048, %s1219, %s1202, 128, 128, 8
        $region68: #{tpu_custom_call.1} parent=39 // pred_fallthru
          _
        // Predicated region
        $region69: #{tpu_custom_call.1} parent=39 // pred_check
          %p1227 = pneg %p197
        $region70: #{tpu_custom_call.1} parent=39 // pred_check_branch
          %1229 = sbr.rel (%p1227) target = $region72
        $region71: #{tpu_custom_call.1} parent=39 // pred_region
          %s1230 = smul.u32 16, %s33
          %s1232 = ssub.s32 1024, 1024
          %1233 = vsyncadd %s1207, %s1232
          %s1234 = smul.addr %s1230, 64
          %s1235 = scalar_lea.hbm %s6, %s1234
          %s1236 = sshll.u32 %s1210, 4
          %s1237 = int_to_ptr.vmem [resolvable:$true] %s1236
          %1242 = dma.vmem_to_hbm [thread:$0]  %s1237, 1024, %s1235, %s1207, 64, 64, 4
        $region72: #{tpu_custom_call.1} parent=39 // pred_fallthru
          _
      $region40: #{tpu_custom_call.1} parent=5 // pred_fallthru
        _
      %p1243 = scmp.le.s32.totalorder 2, %s24
      // Predicated region
      $region73: #{tpu_custom_call.1} parent=5 // pred_check
        %p1244 = pneg %p1243
      $region74: #{tpu_custom_call.1} parent=5 // pred_check_branch
        %1246 = sbr.rel (%p1244) target = $region76
      $region75: #{tpu_custom_call.1} parent=5 // pred_region
        %s1247 = ssub.s32 %s24, 2
        // Predicated region
        $region77: #{tpu_custom_call.1} parent=75 // pred_check
          %p1248 = pneg %p177
        $region78: #{tpu_custom_call.1} parent=75 // pred_check_branch
          %1250 = sbr.rel (%p1248) target = $region80
        $region79: #{tpu_custom_call.1} parent=75 // pred_region
          %s1251 = sand.u32 %s162, 1
          %s1252 = scalar_lea.sflag [#allocation5], %s1251
          %s1253 = sand.u32 %s162, 1
          %s1254 = smul.addr %s1253, 128
          %s1255 = scalar_lea.vmem [#allocation11], %s1254
          %1256 = dma.done %s1252, 2048
        $region80: #{tpu_custom_call.1} parent=75 // pred_fallthru
          _
        // Predicated region
        $region81: #{tpu_custom_call.1} parent=75 // pred_check
          %p1257 = pneg %p203
        $region82: #{tpu_custom_call.1} parent=75 // pred_check_branch
          %1259 = sbr.rel (%p1257) target = $region84
        $region83: #{tpu_custom_call.1} parent=75 // pred_region
          %s1260 = sand.u32 %s188, 1
          %s1261 = scalar_lea.sflag [#allocation13], %s1260
          %s1262 = sand.u32 %s188, 1
          %s1263 = smul.addr %s1262, 64
          %s1264 = scalar_lea.vmem [#allocation12], %s1263
          %1265 = dma.done %s1261, 1024
        $region84: #{tpu_custom_call.1} parent=75 // pred_fallthru
          _
      $region76: #{tpu_custom_call.1} parent=5 // pred_fallthru
        _
    $region6: #{tpu_custom_call.1} parent=1 // loop_footer
      %s28 = sadd.s32 1, %s24
    $region7: #{tpu_custom_call.1} parent=1 // loop_footer_branch
      %23 = sbr.rel target = $region3
    $region8: #{tpu_custom_call.1} parent=1 // loop_exit
      _
    %1266 = vsyncpa [#allocation4], 1
    %s1267 = scalar_lea.sflag [#allocation4], 1
    %1268 = vsyncpa %s1267, 1
    %1269 = vsyncpa [#allocation7], 1
    %1270 = vsyncpa [#allocation10], 1
    %1271 = vsyncpa [#allocation5], 1
    %s1272 = scalar_lea.sflag [#allocation5], 1
    %1273 = vsyncpa %s1272, 1
    %1274 = vsyncpa [#allocation13], 1
    %s1275 = scalar_lea.sflag [#allocation13], 1
    %1276 = vsyncpa %s1275, 1

</llo_original>
